<compile_context>
chip_gen: v7x
topology: tpu7x:2x2x1
jax: 0.10.0
libtpu: 0.0.40
codegen_flags: <defaults>
</compile_context>

<pallas_src>
import functools

import jax
import jax.numpy as jnp
from jax import lax
from jax.experimental import pallas as pl
from jax.experimental.pallas import tpu as pltpu

LANE = 128
SUBLANE = 8


def _round_up(n, m):
    return (n + m - 1) // m * m


def _tpu_vmem_capacity():
    try:
        return int(pltpu.get_tpu_info().vmem_capacity_bytes)
    except Exception:
        return 128 << 20   # v5e/v6e default if the query is unavailable


# ---------------------------------------------------------------------------
# Shared head: LayerNorm -> (fc || proj1) -> ReLU -> proj2 -> fc_comm -> l2norms
# Returns one lane-dense concatenated row block [TB, NCP+NCHP+FP+PP].
# ---------------------------------------------------------------------------
def _oscnet_head(emb_raw, gamma, beta, whead_ref, bhead_ref, w2_ref, b2_ref,
                 wcomm_ref, bcomm_ref, *, feat_dim, ncp):
    fp = gamma.shape[-1]
    # LayerNorm(feat_planes), eps=1e-5; statistics over the true F columns only
    # (padded columns of emb_raw are exactly 0 by construction).
    mean = jnp.sum(emb_raw, axis=-1, keepdims=True) * (1.0 / feat_dim)
    centered = emb_raw - mean
    if feat_dim != fp:
        col_mask = lax.broadcasted_iota(jnp.int32, (1, fp), 1) < feat_dim
        centered = jnp.where(col_mask, centered, 0.0)
    var = jnp.sum(centered * centered, axis=-1, keepdims=True) * (1.0 / feat_dim)
    emb = centered * lax.rsqrt(var + 1e-5) * gamma + beta

    # fused (backbone fc head || proj linear 1): one lane-dense MXU pass
    head = jnp.dot(emb.astype(whead_ref.dtype), whead_ref[...],
                   preferred_element_type=jnp.float32) + bhead_ref[...]
    logits = head[:, :ncp]
    h = jnp.maximum(head[:, ncp:], 0.0)                      # ReLU

    emb_proj = jnp.dot(h.astype(w2_ref.dtype), w2_ref[...],
                       preferred_element_type=jnp.float32) + b2_ref[...]
    logits_comm = jnp.dot(emb_proj.astype(wcomm_ref.dtype), wcomm_ref[...],
                          preferred_element_type=jnp.float32) + bcomm_ref[...]

    # l2norm: x / sqrt(sum(x^2)) -> single EUP rsqrt, no eps (matches reference)
    feat = emb * lax.rsqrt(jnp.sum(emb * emb, axis=-1, keepdims=True))
    feat_proj = emb_proj * lax.rsqrt(
        jnp.sum(emb_proj * emb_proj, axis=-1, keepdims=True))

    # one lane-dense concatenated store: [logits | logits_comm | feat | feat_proj]
    return jnp.concatenate([logits, logits_comm, feat, feat_proj], axis=-1)


# ---------------------------------------------------------------------------
# Path A kernel: one grid axis over batch tiles (x tile fits VMEM budget).
#   flat=True : x_ref is [TB, C*HW_pad]  (lane-dense read; GAP via slice sums)
#   flat=False: x_ref is [TB, C, HW]
# ---------------------------------------------------------------------------
def oscnet_kernel(x_ref, wb_ref, lnp_ref, whead_ref, bhead_ref, w2_ref, b2_ref,
                  wcomm_ref, bcomm_ref, out_ref, *,
                  feat_dim, ncp, hw_pad, inv_hw, fold_backbone, flat):
    C = wb_ref.shape[0]
    lnp = lnp_ref[...]
    bb, gamma, beta = lnp[0:1, :], lnp[1:2, :], lnp[2:3, :]

    if flat:
        x = x_ref[...]                                       # [TB, C*hw_pad]
        ch_sums = [jnp.sum(x[:, c * hw_pad:(c + 1) * hw_pad].astype(jnp.float32),
                           axis=-1, keepdims=True) for c in range(C)]
        if fold_backbone:
            # K = C is tiny: VPU rank-1 accumulate beats a nearly-empty MXU pass
            wb = wb_ref[...].astype(jnp.float32)
            emb_raw = bb
            for c in range(C):
                emb_raw = emb_raw + (ch_sums[c] * inv_hw) * wb[c:c + 1, :]
        else:
            pooled = jnp.concatenate(ch_sums, axis=-1) * inv_hw
            emb_raw = jnp.dot(pooled.astype(wb_ref.dtype), wb_ref[...],
                              preferred_element_type=jnp.float32) + bb
    else:
        pooled = jnp.sum(x_ref[...].astype(jnp.float32), axis=-1) * inv_hw  # [TB, C]
        if fold_backbone:
            wb = wb_ref[...].astype(jnp.float32)
            emb_raw = bb
            for c in range(C):
                emb_raw = emb_raw + pooled[:, c:c + 1] * wb[c:c + 1, :]
        else:
            emb_raw = jnp.dot(pooled.astype(wb_ref.dtype), wb_ref[...],
                              preferred_element_type=jnp.float32) + bb

    out_ref[...] = _oscnet_head(emb_raw, gamma, beta, whead_ref, bhead_ref,
                                w2_ref, b2_ref, wcomm_ref, bcomm_ref,
                                feat_dim=feat_dim, ncp=ncp)


# ---------------------------------------------------------------------------
# Path B kernel: grid = (batch tiles, HW chunks).  Accumulate the GAP into a
# VMEM scratch; run LayerNorm + heads only on the last chunk (pl.when).
# ---------------------------------------------------------------------------
def oscnet_chunked_kernel(x_ref, wb_ref, lnp_ref, whead_ref, bhead_ref, w2_ref,
                          b2_ref, wcomm_ref, bcomm_ref, out_ref, pooled_acc, *,
                          feat_dim, ncp, inv_hw, fold_backbone):
    j = pl.program_id(1)

    @pl.when(j == 0)
    def _():
        pooled_acc[...] = jnp.zeros_like(pooled_acc)

    pooled_acc[...] += jnp.sum(x_ref[...].astype(jnp.float32), axis=-1)

    @pl.when(j == pl.num_programs(1) - 1)
    def _():
        pooled = pooled_acc[...] * inv_hw
        lnp = lnp_ref[...]
        bb, gamma, beta = lnp[0:1, :], lnp[1:2, :], lnp[2:3, :]
        if fold_backbone:
            wb = wb_ref[...].astype(jnp.float32)
            emb_raw = bb
            for c in range(wb.shape[0]):
                emb_raw = emb_raw + pooled[:, c:c + 1] * wb[c:c + 1, :]
        else:
            emb_raw = jnp.dot(pooled.astype(wb_ref.dtype), wb_ref[...],
                              preferred_element_type=jnp.float32) + bb
        out_ref[...] = _oscnet_head(emb_raw, gamma, beta, whead_ref, bhead_ref,
                                    w2_ref, b2_ref, wcomm_ref, bcomm_ref,
                                    feat_dim=feat_dim, ncp=ncp)


# ---------------------------------------------------------------------------
# Parameter packing: pad output dims to lane multiples of 128, fuse wfc || w1,
# pack (backbone bias, LN gamma, LN beta) into one [3, FP] array, bf16 weights.
# ---------------------------------------------------------------------------
def prepare_kernel_params(params, *, fold_backbone, matmul_dtype=jnp.bfloat16):
    C, F = params["wb"].shape
    NC = params["wfc"].shape[1]
    P = params["w2"].shape[1]
    NCH = params["wcomm"].shape[1]
    FP, NCP, PP, NCHP = (_round_up(d, LANE) for d in (F, NC, P, NCH))

    def pad2(w, rows, cols):
        return jnp.pad(w, ((0, rows - w.shape[0]), (0, cols - w.shape[1])))

    # fold path uses wb on the VPU in f32; MXU path wants bf16 (single pass)
    wb = pad2(params["wb"], C, FP).astype(
        jnp.float32 if fold_backbone else matmul_dtype)
    lnp = jnp.concatenate([pad2(params["bb"], 1, FP),
                           pad2(params["gamma"], 1, FP),
                           pad2(params["beta"], 1, FP)], axis=0).astype(jnp.float32)
    whead = jnp.concatenate(
        [pad2(params["wfc"], FP, NCP), pad2(params["w1"], FP, FP)], axis=1
    ).astype(matmul_dtype)
    bhead = jnp.concatenate(
        [pad2(params["bfc"], 1, NCP), pad2(params["b1"], 1, FP)], axis=1
    ).astype(jnp.float32)
    w2 = pad2(params["w2"], FP, PP).astype(matmul_dtype)
    b2 = pad2(params["b2"], 1, PP).astype(jnp.float32)
    wcomm = pad2(params["wcomm"], PP, NCHP).astype(matmul_dtype)
    bcomm = pad2(params["bcomm"], 1, NCHP).astype(jnp.float32)

    kparams = (wb, lnp, whead, bhead, w2, b2, wcomm, bcomm)
    dims = dict(C=C, F=F, NC=NC, P=P, NCH=NCH, FP=FP, NCP=NCP, PP=PP, NCHP=NCHP)
    return kparams, dims


# ---------------------------------------------------------------------------
# Wrapper
# ---------------------------------------------------------------------------
def oscnet_forward(x, params, *, max_tile_b=512, matmul_dtype=jnp.bfloat16,
                   cast_x_bf16=False, force_chunked=False, hw_chunk=None):
    """x: [B, C, H, W] (NCHW). Returns a dict matching OSCNet.forward()."""
    B, C, H, W = x.shape
    HW = H * W

    fold_backbone = C <= 16
    kparams, d = prepare_kernel_params(params, fold_backbone=fold_backbone,
                                       matmul_dtype=matmul_dtype)
    F, NC, P, NCH = d["F"], d["NC"], d["P"], d["NCH"]
    FP, NCP, PP, NCHP = d["FP"], d["NCP"], d["PP"], d["NCHP"]
    TOTAL_OUT = NCP + NCHP + FP + PP

    # optional bf16 x read: halves the dominant HBM stream (numerics knob)
    x_dtype = jnp.bfloat16 if cast_x_bf16 else x.dtype
    x_itemsize = jnp.dtype(x_dtype).itemsize
    sub = 16 if x_itemsize == 2 else SUBLANE

    # ---- generation-aware VMEM budget (v7x: 64 MiB/TC; v5e/v6e: 128 MiB) ----
    phys_vmem = _tpu_vmem_capacity()
    if phys_vmem <= (64 << 20):                       # v7x-class
        tile_budget, vmem_request_cap = 28 << 20, 48 << 20
    else:                                             # v5e / v6e
        tile_budget, vmem_request_cap = phys_vmem // 2, (phys_vmem * 3) // 4

    def _nbytes(a):
        return int(a.size) * a.dtype.itemsize

    weight_bytes = sum(_nbytes(p) for p in kparams)
    # resident weights may still be double-buffered by the pipeline
    avail = tile_budget - 2 * weight_bytes - (2 << 20)

    # ---- x layout: lane-dense flat [B, C*HW_pad] avoids the C<8 sublane tax ----
    HW_pad = _round_up(HW, LANE)
    flat_inflation = HW_pad / HW
    sub_inflation = _round_up(C, sub) / C
    use_flat = (C <= 64) and (flat_inflation <= sub_inflation)

    out_row_bytes = TOTAL_OUT * 4
    x_row_bytes = (C * HW_pad if use_flat
                   else _round_up(C, sub) * HW_pad) * x_itemsize
    per_row_bytes = 2 * (x_row_bytes + out_row_bytes)        # double-buffered tiles
    tb_fit = ((avail // per_row_bytes) // sub) * sub if avail > 0 else 0

    chunked = bool(force_chunked) or tb_fit < sub

    # ---- batch tile: biggest that fits; keep >=2 grid steps for v7x megacore ----
    B_pad0 = _round_up(B, sub)
    TB = min(max_tile_b, B_pad0) if chunked else min(max_tile_b, tb_fit, B_pad0)
    TB = max(sub, (TB // sub) * sub)
    if B_pad0 >= 2 * sub and TB > B_pad0 // 2:
        TB = max(sub, ((B_pad0 // 2) // sub) * sub)

    HWC = n_hw = None
    if chunked:
        use_flat = False
        c_rows = _round_up(C, sub)
        # make sure at least a 128-lane chunk tile fits at this TB
        per_row_min = 2 * (c_rows * LANE * x_itemsize + out_row_bytes)
        if avail > 0:
            TB = min(TB, max(sub, ((avail // per_row_min) // sub) * sub))
        if hw_chunk is not None:
            HWC = int(hw_chunk)
        else:
            HWC = LANE
            m = HW_pad // LANE
            for dcount in range(1, m + 1):                   # largest chunk first
                if m % dcount:
                    continue
                hwc = HW_pad // dcount
                if 2 * TB * (c_rows * hwc * x_itemsize + out_row_bytes) <= avail:
                    HWC = hwc
                    break
        HW_pad = _round_up(HW_pad, HWC)
        n_hw = HW_pad // HWC

    B_pad = _round_up(B, TB)
    nb = B_pad // TB

    # ---- host-side data prep ----
    x3 = x.astype(x_dtype).reshape(B, C, HW)
    pad_hw = (HW_pad - HW) if (chunked or use_flat) else 0
    if pad_hw or B_pad != B:
        x3 = jnp.pad(x3, ((0, B_pad - B), (0, 0), (0, pad_hw)))
    x_in = x3.reshape(B_pad, C * HW_pad) if use_flat else x3

    inv_hw = 1.0 / float(HW)
    if chunked:
        grid = (nb, n_hw)
        kernel = functools.partial(oscnet_chunked_kernel, feat_dim=F, ncp=NCP,
                                   inv_hw=inv_hw, fold_backbone=fold_backbone)
        x_spec = pl.BlockSpec((TB, C, HWC), lambda i, j: (i, 0, j))
        w_specs = [pl.BlockSpec(p.shape, lambda i, j: (0, 0)) for p in kparams]
        out_spec = pl.BlockSpec((TB, TOTAL_OUT), lambda i, j: (i, 0))
        scratch_shapes = [pltpu.VMEM((TB, C), jnp.float32)]
        dim_sem = ("parallel", "arbitrary")
        x_tile_bytes = TB * _round_up(C, sub) * HWC * x_itemsize
    else:
        grid = (nb,)
        kernel = functools.partial(oscnet_kernel, feat_dim=F, ncp=NCP,
                                   hw_pad=HW_pad, inv_hw=inv_hw,
                                   fold_backbone=fold_backbone, flat=use_flat)
        if use_flat:
            x_spec = pl.BlockSpec((TB, C * HW_pad), lambda i: (i, 0))
        else:
            x_spec = pl.BlockSpec((TB, C, HW), lambda i: (i, 0, 0))
        w_specs = [pl.BlockSpec(p.shape, lambda i: (0, 0)) for p in kparams]
        out_spec = pl.BlockSpec((TB, TOTAL_OUT), lambda i: (i, 0))
        scratch_shapes = []
        dim_sem = ("parallel",)
        x_tile_bytes = TB * x_row_bytes

    out_tile_bytes = TB * out_row_bytes
    needed = 2 * weight_bytes + 2 * (x_tile_bytes + out_tile_bytes) + (4 << 20)
    vmem_limit = int(min(vmem_request_cap, max(16 << 20, needed)))

    x_bytes_total = B_pad * C * (HW_pad if (chunked or use_flat) else HW) * x_itemsize
    cost = pl.CostEstimate(
        flops=int(2 * B_pad * (C * HW + C * FP + FP * (NCP + FP)
                               + FP * PP + PP * NCHP)),
        transcendentals=int(3 * B_pad),
        bytes_accessed=int(x_bytes_total + weight_bytes + B_pad * TOTAL_OUT * 4),
    )

    out_padded = pl.pallas_call(
        kernel,
        out_shape=jax.ShapeDtypeStruct((B_pad, TOTAL_OUT), jnp.float32),
        grid=grid,
        in_specs=[x_spec] + w_specs,
        out_specs=out_spec,
        scratch_shapes=scratch_shapes,
        compiler_params=pltpu.CompilerParams(
            dimension_semantics=dim_sem, vmem_limit_bytes=vmem_limit),
        cost_estimate=cost,
    )(x_in, *kparams)

    o1, o2, o3 = NCP, NCP + NCHP, NCP + NCHP + FP
    # TODO(synk): use_rot=True branch (rot_classifier) omitted; module default is use_rot=False.
    return {
        "logits": out_padded[:B, :NC],
        "logits_comm": out_padded[:B, o1:o1 + NCH],
        "feat": out_padded[:B, o2:o2 + F],
        "feat_proj": out_padded[:B, o3:o3 + P],
    }


# ---------------------------------------------------------------------------
# Deterministic parameter construction (shapes follow OSCNet.__init__)
# ---------------------------------------------------------------------------
def make_params(key, in_channels, feat_planes, proj_dim, num_classes, num_heads):
    keys = jax.random.split(key, 8)

    def xavier_normal(k, fan_in, fan_out):
        std = (2.0 / (fan_in + fan_out)) ** 0.5
        return jax.random.normal(k, (fan_in, fan_out), jnp.float32) * std

    return {
        # synthetic backbone feature linear (C -> F)
        "wb": xavier_normal(keys[0], in_channels, feat_planes),
        "bb": jnp.zeros((1, feat_planes), jnp.float32),
        # LayerNorm(feat_planes)
        "gamma": jnp.ones((1, feat_planes), jnp.float32),
        "beta": jnp.zeros((1, feat_planes), jnp.float32),
        # synthetic backbone fc head (F -> num_classes)
        "wfc": xavier_normal(keys[1], feat_planes, num_classes),
        "bfc": jnp.zeros((1, num_classes), jnp.float32),
        # proj: Linear(F, F) -> ReLU -> Linear(F, proj_dim)
        "w1": xavier_normal(keys[2], feat_planes, feat_planes),
        "b1": jax.random.normal(keys[3], (1, feat_planes), jnp.float32) * 0.01,
        "w2": xavier_normal(keys[4], feat_planes, proj_dim),
        "b2": jax.random.normal(keys[5], (1, proj_dim), jnp.float32) * 0.01,
        # fc_comm: Linear(proj_dim, num_classes*num_heads); xavier weight, zero bias
        "wcomm": xavier_normal(keys[6], proj_dim, num_classes * num_heads),
        "bcomm": jnp.zeros((1, num_classes * num_heads), jnp.float32),
    }


# Pure-JAX reference (f32) for a sanity check of the fused/padded kernel.
def oscnet_reference(x, params):
    pooled = jnp.mean(x.astype(jnp.float32), axis=(2, 3))
    emb_raw = pooled @ params["wb"] + params["bb"]
    mean = jnp.mean(emb_raw, -1, keepdims=True)
    var = jnp.mean((emb_raw - mean) ** 2, -1, keepdims=True)
    emb = (emb_raw - mean) / jnp.sqrt(var + 1e-5) * params["gamma"] + params["beta"]
    logits = emb @ params["wfc"] + params["bfc"]
    h = jnp.maximum(emb @ params["w1"] + params["b1"], 0.0)
    emb_proj = h @ params["w2"] + params["b2"]
    logits_comm = emb_proj @ params["wcomm"] + params["bcomm"]
    l2 = lambda v: v / jnp.sqrt(jnp.sum(v * v, -1, keepdims=True))
    return {"logits": logits, "logits_comm": logits_comm,
            "feat": l2(emb), "feat_proj": l2(emb_proj)}


if __name__ == "__main__":
    # small shapes consistent with the module
    B, C, H, W = 2, 4, 16, 16
    FEAT_PLANES = 32   # base.num_features
    PROJ_DIM = 16
    NUM_CLASSES = 6
    NUM_HEADS = 2

    key = jax.random.PRNGKey(0)
    k_x, k_p = jax.random.split(key)
    x = jax.random.normal(k_x, (B, C, H, W), jnp.float32)
    params = make_params(k_p, C, FEAT_PLANES, PROJ_DIM, NUM_CLASSES, NUM_HEADS)

    ref = oscnet_reference(x, params)

    # Path A: lane-dense flat x layout, single batch grid axis.
    out = oscnet_forward(x, params)
    jax.block_until_ready(out)
    assert out["logits"].shape == (B, NUM_CLASSES)
    assert out["logits_comm"].shape == (B, NUM_CLASSES * NUM_HEADS)
    assert out["feat"].shape == (B, FEAT_PLANES)
    assert out["feat_proj"].shape == (B, PROJ_DIM)
    for k in out:
        err = float(jnp.max(jnp.abs(out[k] - ref[k])))
        assert err < 0.1, (k, err)   # loose: matmul weights run in bf16

    # Path B: chunked-HW accumulation path (auto-selected for large H*W);
    # forced here so both code paths are exercised.
    out_c = oscnet_forward(x, params, force_chunked=True, hw_chunk=128)
    jax.block_until_ready(out_c)
    for k in out_c:
        err = float(jnp.max(jnp.abs(out_c[k] - ref[k])))
        assert err < 0.1, (k, err)

    print("KERNEL_OK")
</pallas_src>

<mosaic_0001>
module attributes {stable_mosaic.version = 11 : i64} {
  func.func @oscnet_kernel(%arg0: i32, %arg1: memref<8x1024xf32, #tpu.memory_space<vmem>>, %arg2: memref<4x128xf32, #tpu.memory_space<vmem>>, %arg3: memref<3x128xf32, #tpu.memory_space<vmem>>, %arg4: memref<128x256xbf16, #tpu.memory_space<vmem>>, %arg5: memref<1x256xf32, #tpu.memory_space<vmem>>, %arg6: memref<128x128xbf16, #tpu.memory_space<vmem>>, %arg7: memref<1x128xf32, #tpu.memory_space<vmem>>, %arg8: memref<128x128xbf16, #tpu.memory_space<vmem>>, %arg9: memref<1x128xf32, #tpu.memory_space<vmem>>, %arg10: memref<8x512xf32, #tpu.memory_space<vmem>>) attributes {dimension_semantics = [#tpu.dimension_semantics<parallel>], iteration_bounds = array<i64: 1>, scalar_prefetch = 0 : i64, scratch_operands = 0 : i64, tpu.core_type = #tpu.core_type<tc>, window_params = [{transform_indices = @transform_0, window_bounds = array<i64: 8, 1024>}, {pipeline_mode = #tpu.pipeline_mode<synchronous>, transform_indices = @transform_1, window_bounds = array<i64: 4, 128>}, {pipeline_mode = #tpu.pipeline_mode<synchronous>, transform_indices = @transform_2, window_bounds = array<i64: 3, 128>}, {pipeline_mode = #tpu.pipeline_mode<synchronous>, transform_indices = @transform_3, window_bounds = array<i64: 128, 256>}, {pipeline_mode = #tpu.pipeline_mode<synchronous>, transform_indices = @transform_4, window_bounds = array<i64: 1, 256>}, {pipeline_mode = #tpu.pipeline_mode<synchronous>, transform_indices = @transform_5, window_bounds = array<i64: 128, 128>}, {pipeline_mode = #tpu.pipeline_mode<synchronous>, transform_indices = @transform_6, window_bounds = array<i64: 1, 128>}, {pipeline_mode = #tpu.pipeline_mode<synchronous>, transform_indices = @transform_7, window_bounds = array<i64: 128, 128>}, {pipeline_mode = #tpu.pipeline_mode<synchronous>, transform_indices = @transform_8, window_bounds = array<i64: 1, 128>}, {transform_indices = @transform_9, window_bounds = array<i64: 8, 512>}]} {
    %c0 = arith.constant 0 : index
    %c0_0 = arith.constant 0 : index
    %0 = vector.load %arg3[%c0, %c0_0] : memref<3x128xf32, #tpu.memory_space<vmem>>, vector<3x128xf32>
    %1 = vector.extract_strided_slice %0 {offsets = [0, 0], sizes = [1, 128], strides = [1, 1]} : vector<3x128xf32> to vector<1x128xf32>
    %2 = vector.extract_strided_slice %0 {offsets = [1, 0], sizes = [1, 128], strides = [1, 1]} : vector<3x128xf32> to vector<1x128xf32>
    %3 = vector.extract_strided_slice %0 {offsets = [2, 0], sizes = [1, 128], strides = [1, 1]} : vector<3x128xf32> to vector<1x128xf32>
    %c0_1 = arith.constant 0 : index
    %c0_2 = arith.constant 0 : index
    %4 = vector.load %arg1[%c0_1, %c0_2] : memref<8x1024xf32, #tpu.memory_space<vmem>>, vector<8x1024xf32>
    %5 = vector.extract_strided_slice %4 {offsets = [0, 0], sizes = [8, 256], strides = [1, 1]} : vector<8x1024xf32> to vector<8x256xf32>
    %cst = arith.constant dense<0.000000e+00> : vector<8xf32>
    %6 = vector.multi_reduction <add>, %5, %cst [1] : vector<8x256xf32> to vector<8xf32>
    %7 = vector.shape_cast %6 : vector<8xf32> to vector<8x1xf32>
    %8 = vector.extract_strided_slice %4 {offsets = [0, 256], sizes = [8, 256], strides = [1, 1]} : vector<8x1024xf32> to vector<8x256xf32>
    %cst_3 = arith.constant dense<0.000000e+00> : vector<8xf32>
    %9 = vector.multi_reduction <add>, %8, %cst_3 [1] : vector<8x256xf32> to vector<8xf32>
    %10 = vector.shape_cast %9 : vector<8xf32> to vector<8x1xf32>
    %11 = vector.extract_strided_slice %4 {offsets = [0, 512], sizes = [8, 256], strides = [1, 1]} : vector<8x1024xf32> to vector<8x256xf32>
    %cst_4 = arith.constant dense<0.000000e+00> : vector<8xf32>
    %12 = vector.multi_reduction <add>, %11, %cst_4 [1] : vector<8x256xf32> to vector<8xf32>
    %13 = vector.shape_cast %12 : vector<8xf32> to vector<8x1xf32>
    %14 = vector.extract_strided_slice %4 {offsets = [0, 768], sizes = [8, 256], strides = [1, 1]} : vector<8x1024xf32> to vector<8x256xf32>
    %cst_5 = arith.constant dense<0.000000e+00> : vector<8xf32>
    %15 = vector.multi_reduction <add>, %14, %cst_5 [1] : vector<8x256xf32> to vector<8xf32>
    %16 = vector.shape_cast %15 : vector<8xf32> to vector<8x1xf32>
    %c0_6 = arith.constant 0 : index
    %c0_7 = arith.constant 0 : index
    %17 = vector.load %arg2[%c0_6, %c0_7] : memref<4x128xf32, #tpu.memory_space<vmem>>, vector<4x128xf32>
    %cst_8 = arith.constant 3.906250e-03 : f32
    %18 = vector.broadcast %cst_8 : f32 to vector<8x1xf32>
    %19 = arith.mulf %7, %18 : vector<8x1xf32>
    %20 = vector.extract_strided_slice %17 {offsets = [0, 0], sizes = [1, 128], strides = [1, 1]} : vector<4x128xf32> to vector<1x128xf32>
    %21 = vector.broadcast %19 : vector<8x1xf32> to vector<8x128xf32>
    %22 = vector.broadcast %20 : vector<1x128xf32> to vector<8x128xf32>
    %23 = arith.mulf %21, %22 : vector<8x128xf32>
    %24 = vector.broadcast %1 : vector<1x128xf32> to vector<8x128xf32>
    %25 = arith.addf %24, %23 : vector<8x128xf32>
    %cst_9 = arith.constant 3.906250e-03 : f32
    %26 = vector.broadcast %cst_9 : f32 to vector<8x1xf32>
    %27 = arith.mulf %10, %26 : vector<8x1xf32>
    %28 = vector.extract_strided_slice %17 {offsets = [1, 0], sizes = [1, 128], strides = [1, 1]} : vector<4x128xf32> to vector<1x128xf32>
    %29 = vector.broadcast %27 : vector<8x1xf32> to vector<8x128xf32>
    %30 = vector.broadcast %28 : vector<1x128xf32> to vector<8x128xf32>
    %31 = arith.mulf %29, %30 : vector<8x128xf32>
    %32 = arith.addf %25, %31 : vector<8x128xf32>
    %cst_10 = arith.constant 3.906250e-03 : f32
    %33 = vector.broadcast %cst_10 : f32 to vector<8x1xf32>
    %34 = arith.mulf %13, %33 : vector<8x1xf32>
    %35 = vector.extract_strided_slice %17 {offsets = [2, 0], sizes = [1, 128], strides = [1, 1]} : vector<4x128xf32> to vector<1x128xf32>
    %36 = vector.broadcast %34 : vector<8x1xf32> to vector<8x128xf32>
    %37 = vector.broadcast %35 : vector<1x128xf32> to vector<8x128xf32>
    %38 = arith.mulf %36, %37 : vector<8x128xf32>
    %39 = arith.addf %32, %38 : vector<8x128xf32>
    %cst_11 = arith.constant 3.906250e-03 : f32
    %40 = vector.broadcast %cst_11 : f32 to vector<8x1xf32>
    %41 = arith.mulf %16, %40 : vector<8x1xf32>
    %42 = vector.extract_strided_slice %17 {offsets = [3, 0], sizes = [1, 128], strides = [1, 1]} : vector<4x128xf32> to vector<1x128xf32>
    %43 = vector.broadcast %41 : vector<8x1xf32> to vector<8x128xf32>
    %44 = vector.broadcast %42 : vector<1x128xf32> to vector<8x128xf32>
    %45 = arith.mulf %43, %44 : vector<8x128xf32>
    %46 = arith.addf %39, %45 : vector<8x128xf32>
    %cst_12 = arith.constant dense<0.000000e+00> : vector<8xf32>
    %47 = vector.multi_reduction <add>, %46, %cst_12 [1] : vector<8x128xf32> to vector<8xf32>
    %48 = vector.shape_cast %47 : vector<8xf32> to vector<8x1xf32>
    %cst_13 = arith.constant 3.125000e-02 : f32
    %49 = vector.broadcast %cst_13 : f32 to vector<8x1xf32>
    %50 = arith.mulf %48, %49 : vector<8x1xf32>
    %51 = vector.broadcast %50 : vector<8x1xf32> to vector<8x128xf32>
    %52 = arith.subf %46, %51 : vector<8x128xf32>
    %53 = tpu.iota {dimensions = array<i32: 1>} : vector<1x128xi32>
    %c32_i32 = arith.constant 32 : i32
    %54 = vector.broadcast %c32_i32 : i32 to vector<1x128xi32>
    %55 = arith.cmpi slt, %53, %54 : vector<1x128xi32>
    %cst_14 = arith.constant 0.000000e+00 : f32
    %56 = vector.shape_cast %55 : vector<1x128xi1> to vector<1x128xi1>
    %57 = vector.broadcast %56 : vector<1x128xi1> to vector<8x128xi1>
    %58 = vector.broadcast %cst_14 : f32 to vector<8x128xf32>
    %59 = arith.select %57, %52, %58 : vector<8x128xi1>, vector<8x128xf32>
    %60 = arith.mulf %59, %59 : vector<8x128xf32>
    %cst_15 = arith.constant dense<0.000000e+00> : vector<8xf32>
    %61 = vector.multi_reduction <add>, %60, %cst_15 [1] : vector<8x128xf32> to vector<8xf32>
    %62 = vector.shape_cast %61 : vector<8xf32> to vector<8x1xf32>
    %cst_16 = arith.constant 3.125000e-02 : f32
    %63 = vector.broadcast %cst_16 : f32 to vector<8x1xf32>
    %64 = arith.mulf %62, %63 : vector<8x1xf32>
    %cst_17 = arith.constant 9.99999974E-6 : f32
    %65 = vector.broadcast %cst_17 : f32 to vector<8x1xf32>
    %66 = arith.addf %64, %65 : vector<8x1xf32>
    %67 = math.rsqrt %66 : vector<8x1xf32>
    %68 = vector.broadcast %67 : vector<8x1xf32> to vector<8x128xf32>
    %69 = arith.mulf %59, %68 : vector<8x128xf32>
    %70 = vector.broadcast %2 : vector<1x128xf32> to vector<8x128xf32>
    %71 = arith.mulf %69, %70 : vector<8x128xf32>
    %72 = vector.broadcast %3 : vector<1x128xf32> to vector<8x128xf32>
    %73 = arith.addf %71, %72 : vector<8x128xf32>
    %74 = arith.truncf %73 : vector<8x128xf32> to vector<8x128xbf16>
    %c0_18 = arith.constant 0 : index
    %c0_19 = arith.constant 0 : index
    %75 = vector.load %arg4[%c0_18, %c0_19] : memref<128x256xbf16, #tpu.memory_space<vmem>>, vector<128x256xbf16>
    %cst_20 = arith.constant dense<0.000000e+00> : vector<8x256xf32>
    %76 = tpu.matmul %74, %75, %cst_20 {dimension_numbers = #tpu.dot_dimension_numbers<[1], [0], [0], [1], [0, 0, 1, 1], [], []>} : vector<8x128xbf16>, vector<128x256xbf16>, vector<8x256xf32> -> vector<8x256xf32>
    %c0_21 = arith.constant 0 : index
    %c0_22 = arith.constant 0 : index
    %77 = vector.load %arg5[%c0_21, %c0_22] : memref<1x256xf32, #tpu.memory_space<vmem>>, vector<1x256xf32>
    %78 = vector.broadcast %77 : vector<1x256xf32> to vector<8x256xf32>
    %79 = arith.addf %76, %78 : vector<8x256xf32>
    %80 = vector.extract_strided_slice %79 {offsets = [0, 0], sizes = [8, 128], strides = [1, 1]} : vector<8x256xf32> to vector<8x128xf32>
    %81 = vector.extract_strided_slice %79 {offsets = [0, 128], sizes = [8, 128], strides = [1, 1]} : vector<8x256xf32> to vector<8x128xf32>
    %cst_23 = arith.constant 0.000000e+00 : f32
    %82 = vector.broadcast %cst_23 : f32 to vector<8x128xf32>
    %83 = arith.maximumf %81, %82 : vector<8x128xf32>
    %84 = arith.truncf %83 : vector<8x128xf32> to vector<8x128xbf16>
    %c0_24 = arith.constant 0 : index
    %c0_25 = arith.constant 0 : index
    %85 = vector.load %arg6[%c0_24, %c0_25] : memref<128x128xbf16, #tpu.memory_space<vmem>>, vector<128x128xbf16>
    %cst_26 = arith.constant dense<0.000000e+00> : vector<8x128xf32>
    %86 = tpu.matmul %84, %85, %cst_26 {dimension_numbers = #tpu.dot_dimension_numbers<[1], [0], [0], [1], [0, 0, 1, 1], [], []>} : vector<8x128xbf16>, vector<128x128xbf16>, vector<8x128xf32> -> vector<8x128xf32>
    %c0_27 = arith.constant 0 : index
    %c0_28 = arith.constant 0 : index
    %87 = vector.load %arg7[%c0_27, %c0_28] : memref<1x128xf32, #tpu.memory_space<vmem>>, vector<1x128xf32>
    %88 = vector.broadcast %87 : vector<1x128xf32> to vector<8x128xf32>
    %89 = arith.addf %86, %88 : vector<8x128xf32>
    %90 = arith.truncf %89 : vector<8x128xf32> to vector<8x128xbf16>
    %c0_29 = arith.constant 0 : index
    %c0_30 = arith.constant 0 : index
    %91 = vector.load %arg8[%c0_29, %c0_30] : memref<128x128xbf16, #tpu.memory_space<vmem>>, vector<128x128xbf16>
    %cst_31 = arith.constant dense<0.000000e+00> : vector<8x128xf32>
    %92 = tpu.matmul %90, %91, %cst_31 {dimension_numbers = #tpu.dot_dimension_numbers<[1], [0], [0], [1], [0, 0, 1, 1], [], []>} : vector<8x128xbf16>, vector<128x128xbf16>, vector<8x128xf32> -> vector<8x128xf32>
    %c0_32 = arith.constant 0 : index
    %c0_33 = arith.constant 0 : index
    %93 = vector.load %arg9[%c0_32, %c0_33] : memref<1x128xf32, #tpu.memory_space<vmem>>, vector<1x128xf32>
    %94 = vector.broadcast %93 : vector<1x128xf32> to vector<8x128xf32>
    %95 = arith.addf %92, %94 : vector<8x128xf32>
    %96 = arith.mulf %73, %73 : vector<8x128xf32>
    %cst_34 = arith.constant dense<0.000000e+00> : vector<8xf32>
    %97 = vector.multi_reduction <add>, %96, %cst_34 [1] : vector<8x128xf32> to vector<8xf32>
    %98 = vector.shape_cast %97 : vector<8xf32> to vector<8x1xf32>
    %99 = math.rsqrt %98 : vector<8x1xf32>
    %100 = vector.broadcast %99 : vector<8x1xf32> to vector<8x128xf32>
    %101 = arith.mulf %73, %100 : vector<8x128xf32>
    %102 = arith.mulf %89, %89 : vector<8x128xf32>
    %cst_35 = arith.constant dense<0.000000e+00> : vector<8xf32>
    %103 = vector.multi_reduction <add>, %102, %cst_35 [1] : vector<8x128xf32> to vector<8xf32>
    %104 = vector.shape_cast %103 : vector<8xf32> to vector<8x1xf32>
    %105 = math.rsqrt %104 : vector<8x1xf32>
    %106 = vector.broadcast %105 : vector<8x1xf32> to vector<8x128xf32>
    %107 = arith.mulf %89, %106 : vector<8x128xf32>
    %108 = tpu.concatenate %80, %95, %101, %107 in 1 : vector<8x128xf32>, vector<8x128xf32>, vector<8x128xf32>, vector<8x128xf32> -> vector<8x512xf32>
    %c0_36 = arith.constant 0 : index
    %c0_37 = arith.constant 0 : index
    %109 = vector.load %arg10[%c0_36, %c0_37] : memref<8x512xf32, #tpu.memory_space<vmem>>, vector<8x512xf32>
    tpu.vector_store %arg10[%c0_36, %c0_37], %108 {strides = array<i32>} : memref<8x512xf32, #tpu.memory_space<vmem>>, vector<8x512xf32>,
    return
  }
  func.func @transform_0(%arg0: i32) -> (i32, i32) {
    %c0_i32 = arith.constant 0 : i32
    %c0_i32_0 = arith.constant 0 : i32
    return %arg0, %c0_i32 : i32, i32
  }
  func.func @transform_1(%arg0: i32) -> (i32, i32) {
    %c0_i32 = arith.constant 0 : i32
    %c0_i32_0 = arith.constant 0 : i32
    %c0_i32_1 = arith.constant 0 : i32
    return %c0_i32, %c0_i32_0 : i32, i32
  }
  func.func @transform_2(%arg0: i32) -> (i32, i32) {
    %c0_i32 = arith.constant 0 : i32
    %c0_i32_0 = arith.constant 0 : i32
    %c0_i32_1 = arith.constant 0 : i32
    return %c0_i32, %c0_i32_0 : i32, i32
  }
  func.func @transform_3(%arg0: i32) -> (i32, i32) {
    %c0_i32 = arith.constant 0 : i32
    %c0_i32_0 = arith.constant 0 : i32
    %c0_i32_1 = arith.constant 0 : i32
    return %c0_i32, %c0_i32_0 : i32, i32
  }
  func.func @transform_4(%arg0: i32) -> (i32, i32) {
    %c0_i32 = arith.constant 0 : i32
    %c0_i32_0 = arith.constant 0 : i32
    %c0_i32_1 = arith.constant 0 : i32
    return %c0_i32, %c0_i32_0 : i32, i32
  }
  func.func @transform_5(%arg0: i32) -> (i32, i32) {
    %c0_i32 = arith.constant 0 : i32
    %c0_i32_0 = arith.constant 0 : i32
    %c0_i32_1 = arith.constant 0 : i32
    return %c0_i32, %c0_i32_0 : i32, i32
  }
  func.func @transform_6(%arg0: i32) -> (i32, i32) {
    %c0_i32 = arith.constant 0 : i32
    %c0_i32_0 = arith.constant 0 : i32
    %c0_i32_1 = arith.constant 0 : i32
    return %c0_i32, %c0_i32_0 : i32, i32
  }
  func.func @transform_7(%arg0: i32) -> (i32, i32) {
    %c0_i32 = arith.constant 0 : i32
    %c0_i32_0 = arith.constant 0 : i32
    %c0_i32_1 = arith.constant 0 : i32
    return %c0_i32, %c0_i32_0 : i32, i32
  }
  func.func @transform_8(%arg0: i32) -> (i32, i32) {
    %c0_i32 = arith.constant 0 : i32
    %c0_i32_0 = arith.constant 0 : i32
    %c0_i32_1 = arith.constant 0 : i32
    return %c0_i32, %c0_i32_0 : i32, i32
  }
  func.func @transform_9(%arg0: i32) -> (i32, i32) {
    %c0_i32 = arith.constant 0 : i32
    %c0_i32_0 = arith.constant 0 : i32
    return %arg0, %c0_i32 : i32, i32
  }
}

</mosaic_0001>

<llo_original>
// kernel: tpu_custom_call.1
$region0: #{tpu_custom_call.1}
  #allocation0 [shape = 'u32[]', space=smem, size = 0x4, offset = 0x4, fixed_abs, tag = 'smem constant byte address 0x4 - core index']
  #allocation1 [shape = 'u32[144,128]{1,0:T(1,128)}', space=vmem, size = 0x12000, scoped, tag = 'internal scratch']
  %s0 = inlined_call_operand.hbm [shape: f32[8,1024], index: 0, kind: input, shape index: {}]
  %s1 = inlined_call_operand.hbm [shape: f32[4,128], index: 1, kind: input, shape index: {}]
  %s2 = inlined_call_operand.vmem [shape: f32[3,128], index: 2, kind: input, shape index: {}]
  %s3 = inlined_call_operand.hbm [shape: bf16[128,256], index: 3, kind: input, shape index: {}]
  %s4 = inlined_call_operand.vmem [shape: f32[1,256], index: 4, kind: input, shape index: {}]
  %s5 = inlined_call_operand.hbm [shape: bf16[128,128], index: 5, kind: input, shape index: {}]
  %s6 = inlined_call_operand.vmem [shape: f32[1,128], index: 6, kind: input, shape index: {}]
  %s7 = inlined_call_operand.hbm [shape: bf16[128,128], index: 7, kind: input, shape index: {}]
  %s8 = inlined_call_operand.vmem [shape: f32[1,128], index: 8, kind: input, shape index: {}]
  %s9 = inlined_call_operand.hbm [shape: f32[8,512], index: 9, kind: output, shape index: {}]
  %s10 = sld [smem:[#allocation0]]
  $region66: #{tpu_custom_call.1} parent=0
    _
  %s12 = ssub.s32 1, %s10
  %s13 = scalar_select 0, %s12, %s10
  $region1: #{tpu_custom_call.1} parent=0
    #allocation2 [shape = 'u8[32768]{0}', space=vmem, size = 0x8000, scoped, tag = 'input window, operand 0, single buffered']
    #allocation3 [shape = 's32[1]{0}', space=sflag, size = 0x4, scoped, tag = 'scoped memory for tpu_custom_call.1']
    #allocation4 [shape = 's32[1]{0}', space=sflag, size = 0x4, scoped, tag = 'scoped memory for tpu_custom_call.1']
    #allocation5 [shape = 'u8[2048]{0}', space=vmem, size = 0x800, scoped, tag = 'input window, operand 1, single buffered']
    #allocation6 [shape = 's32[1]{0}', space=sflag, size = 0x4, scoped, tag = 'scoped memory for tpu_custom_call.1']
    #allocation7 [shape = 'u8[65536]{0}', space=vmem, size = 0x10000, scoped, tag = 'input window, operand 3, single buffered']
    #allocation8 [shape = 'u8[32768]{0}', space=vmem, size = 0x8000, scoped, tag = 'input window, operand 5, single buffered']
    #allocation9 [shape = 's32[1]{0}', space=sflag, size = 0x4, scoped, tag = 'scoped memory for tpu_custom_call.1']
    #allocation10 [shape = 'u8[32768]{0}', space=vmem, size = 0x8000, scoped, tag = 'input window, operand 7, single buffered']
    #allocation11 [shape = 'u8[16384]{0}', space=vmem, size = 0x4000, scoped, tag = 'output window, operand 0, single buffered']
    %14 = vsyncpa [#allocation3], 0
    %15 = vsyncpa [#allocation6], 0
    %16 = vsyncpa [#allocation9], 0
    %17 = vsyncpa [#allocation4], 0
    // Predicated region
    $region2: #{tpu_custom_call.1} parent=1 // pred_check
      _
    $region3: #{tpu_custom_call.1} parent=1 // pred_check_branch
      %19 = sbr.rel (0) target = $region5
    $region4: #{tpu_custom_call.1} parent=1 // pred_region
      %s21 = ssub.s32 1024, 1024
      %22 = vsyncadd [#allocation3], %s21
      %s24 = sshll.u32 [#allocation2], 4
      %s25 = int_to_ptr.vmem [resolvable:$true] %s24
      %27 = dma.hbm_to_vmem [thread:$0]  %s0, 1024, %s25, [#allocation3]
    $region5: #{tpu_custom_call.1} parent=1 // pred_fallthru
      _
    // Predicated region
    $region6: #{tpu_custom_call.1} parent=1 // pred_check
      _
    $region7: #{tpu_custom_call.1} parent=1 // pred_check_branch
      %29 = sbr.rel (0) target = $region9
    $region8: #{tpu_custom_call.1} parent=1 // pred_region
      %s31 = ssub.s32 64, 64
      %32 = vsyncadd [#allocation6], %s31
      %s34 = sshll.u32 [#allocation5], 4
      %s35 = int_to_ptr.vmem [resolvable:$true] %s34
      %37 = dma.hbm_to_vmem [thread:$0]  %s1, 64, %s35, [#allocation6]
    $region9: #{tpu_custom_call.1} parent=1 // pred_fallthru
      _
    // Predicated region
    $region10: #{tpu_custom_call.1} parent=1 // pred_check
      _
    $region11: #{tpu_custom_call.1} parent=1 // pred_check_branch
      %39 = sbr.rel (0) target = $region13
    $region12: #{tpu_custom_call.1} parent=1 // pred_region
      _
    $region13: #{tpu_custom_call.1} parent=1 // pred_fallthru
      _
    // Predicated region
    $region14: #{tpu_custom_call.1} parent=1 // pred_check
      _
    $region15: #{tpu_custom_call.1} parent=1 // pred_check_branch
      %41 = sbr.rel (0) target = $region17
    $region16: #{tpu_custom_call.1} parent=1 // pred_region
      %s43 = ssub.s32 2048, 2048
      %44 = vsyncadd [#allocation6], %s43
      %s45 = sshll.u32 [#allocation7], 4
      %s46 = int_to_ptr.vmem [resolvable:$true] %s45
      %51 = dma.hbm_to_vmem [thread:$0]  %s3, 2048, %s46, [#allocation6], 128, 128, 8
    $region17: #{tpu_custom_call.1} parent=1 // pred_fallthru
      _
    // Predicated region
    $region18: #{tpu_custom_call.1} parent=1 // pred_check
      _
    $region19: #{tpu_custom_call.1} parent=1 // pred_check_branch
      %53 = sbr.rel (0) target = $region21
    $region20: #{tpu_custom_call.1} parent=1 // pred_region
      _
    $region21: #{tpu_custom_call.1} parent=1 // pred_fallthru
      _
    // Predicated region
    $region22: #{tpu_custom_call.1} parent=1 // pred_check
      _
    $region23: #{tpu_custom_call.1} parent=1 // pred_check_branch
      %55 = sbr.rel (0) target = $region25
    $region24: #{tpu_custom_call.1} parent=1 // pred_region
      %s57 = ssub.s32 1024, 1024
      %58 = vsyncadd [#allocation9], %s57
      %s59 = sshll.u32 [#allocation8], 4
      %s60 = int_to_ptr.vmem [resolvable:$true] %s59
      %65 = dma.hbm_to_vmem [thread:$0]  %s5, 1024, %s60, [#allocation9], 64, 64, 4
    $region25: #{tpu_custom_call.1} parent=1 // pred_fallthru
      _
    // Predicated region
    $region26: #{tpu_custom_call.1} parent=1 // pred_check
      _
    $region27: #{tpu_custom_call.1} parent=1 // pred_check_branch
      %67 = sbr.rel (0) target = $region29
    $region28: #{tpu_custom_call.1} parent=1 // pred_region
      _
    $region29: #{tpu_custom_call.1} parent=1 // pred_fallthru
      _
    // Predicated region
    $region30: #{tpu_custom_call.1} parent=1 // pred_check
      _
    $region31: #{tpu_custom_call.1} parent=1 // pred_check_branch
      %69 = sbr.rel (0) target = $region33
    $region32: #{tpu_custom_call.1} parent=1 // pred_region
      %s71 = ssub.s32 1024, 1024
      %72 = vsyncadd [#allocation9], %s71
      %s73 = sshll.u32 [#allocation10], 4
      %s74 = int_to_ptr.vmem [resolvable:$true] %s73
      %79 = dma.hbm_to_vmem [thread:$0]  %s7, 1024, %s74, [#allocation9], 64, 64, 4
    $region33: #{tpu_custom_call.1} parent=1 // pred_fallthru
      _
    // Predicated region
    $region34: #{tpu_custom_call.1} parent=1 // pred_check
      _
    $region35: #{tpu_custom_call.1} parent=1 // pred_check_branch
      %81 = sbr.rel (0) target = $region37
    $region36: #{tpu_custom_call.1} parent=1 // pred_region
      _
    $region37: #{tpu_custom_call.1} parent=1 // pred_fallthru
      _
    // Predicated region
    $region38: #{tpu_custom_call.1} parent=1 // pred_check
      _
    $region39: #{tpu_custom_call.1} parent=1 // pred_check_branch
      %83 = sbr.rel (0) target = $region41
    $region40: #{tpu_custom_call.1} parent=1 // pred_region
      %84 = dma.done [#allocation3], 1024
    $region41: #{tpu_custom_call.1} parent=1 // pred_fallthru
      _
    // Predicated region
    $region42: #{tpu_custom_call.1} parent=1 // pred_check
      _
    $region43: #{tpu_custom_call.1} parent=1 // pred_check_branch
      %86 = sbr.rel (0) target = $region45
    $region44: #{tpu_custom_call.1} parent=1 // pred_region
      %87 = dma.done [#allocation6], 64
    $region45: #{tpu_custom_call.1} parent=1 // pred_fallthru
      _
    // Predicated region
    $region46: #{tpu_custom_call.1} parent=1 // pred_check
      _
    $region47: #{tpu_custom_call.1} parent=1 // pred_check_branch
      %89 = sbr.rel (0) target = $region49
    $region48: #{tpu_custom_call.1} parent=1 // pred_region
      %90 = dma.done [#allocation6], 2048
    $region49: #{tpu_custom_call.1} parent=1 // pred_fallthru
      _
    // Predicated region
    $region50: #{tpu_custom_call.1} parent=1 // pred_check
      _
    $region51: #{tpu_custom_call.1} parent=1 // pred_check_branch
      %92 = sbr.rel (0) target = $region53
    $region52: #{tpu_custom_call.1} parent=1 // pred_region
      %93 = dma.done [#allocation9], 1024
    $region53: #{tpu_custom_call.1} parent=1 // pred_fallthru
      _
    // Predicated region
    $region54: #{tpu_custom_call.1} parent=1 // pred_check
      _
    $region55: #{tpu_custom_call.1} parent=1 // pred_check_branch
      %95 = sbr.rel (0) target = $region57
    $region56: #{tpu_custom_call.1} parent=1 // pred_region
      %96 = dma.done [#allocation9], 1024
    $region57: #{tpu_custom_call.1} parent=1 // pred_fallthru
      _
    %v98 = vld [vmem:[%s2] sm:$0x7]
    %v99 = vld [vmem:[#allocation2] sm:$0xff]
    %v100 = vld [vmem:[#allocation2 + $0x8] sm:$0xff]
    %v101 = vld [vmem:[#allocation2 + $0x10] sm:$0xff]
    %v102 = vld [vmem:[#allocation2 + $0x18] sm:$0xff]
    %v103 = vld [vmem:[#allocation2 + $0x20] sm:$0xff]
    %v104 = vld [vmem:[#allocation2 + $0x28] sm:$0xff]
    %v105 = vld [vmem:[#allocation2 + $0x30] sm:$0xff]
    %v106 = vld [vmem:[#allocation2 + $0x38] sm:$0xff]
    %v107 = vadd.f32 %v99, %v100
    %108 = vadd.xlane.f32.xlu0 %v107
    %v109 = vpop.xlane.xlu0 %108
    %v110 = vadd.f32 %v101, %v102
    %111 = vadd.xlane.f32.xlu0 %v110
    %v112 = vpop.xlane.xlu0 %111
    %v113 = vadd.f32 %v103, %v104
    %114 = vadd.xlane.f32.xlu0 %v113
    %v115 = vpop.xlane.xlu0 %114
    %v116 = vadd.f32 %v105, %v106
    %117 = vadd.xlane.f32.xlu0 %v116
    %v118 = vpop.xlane.xlu0 %117
    %v119 = vld [vmem:[#allocation5] sm:$0xf]
    %v120 = vmul.f32 %v109, 0.00390625
    %v121 = vlaneseq
    %v122 = vshrl.u32 %v121, 7
    %v123 = vsub.s32 0, %v122
    %v124 = vrot.slane %v119, %v123
    %v125 = vmul.f32 %v120, %v124
    %v126 = vlaneseq
    %v127 = vshrl.u32 %v126, 7
    %v128 = vsub.s32 0, %v127
    %v129 = vrot.slane %v98, %v128
    %v130 = vadd.f32 %v129, %v125
    %v131 = vmul.f32 %v112, 0.00390625
    %v132 = vlaneseq
    %v133 = vshrl.u32 %v132, 7
    %v134 = vsub.s32 1, %v133
    %v135 = vrot.slane %v119, %v134
    %v136 = vmul.f32 %v131, %v135
    %v137 = vadd.f32 %v130, %v136
    %v138 = vmul.f32 %v115, 0.00390625
    %v139 = vlaneseq
    %v140 = vshrl.u32 %v139, 7
    %v141 = vsub.s32 2, %v140
    %v142 = vrot.slane %v119, %v141
    %v143 = vmul.f32 %v138, %v142
    %v144 = vadd.f32 %v137, %v143
    %v145 = vmul.f32 %v118, 0.00390625
    %v146 = vlaneseq
    %v147 = vshrl.u32 %v146, 7
    %v148 = vsub.s32 3, %v147
    %v149 = vrot.slane %v119, %v148
    %v150 = vmul.f32 %v145, %v149
    %v151 = vadd.f32 %v144, %v150
    %152 = vadd.xlane.f32.xlu0 %v151
    %v153 = vpop.xlane.xlu0 %152
    %v154 = vmul.f32 %v153, 0.03125
    %v155 = vsub.f32 %v151, %v154
    %v156 = vlaneseq
    %v157 = vand.u32 %v156, 127
    %vm158 = vcmp.lt.s32.totalorder %v157, 32
    %v159 = vsel %vm158, 1, 0
    %vm160 = vcmp.eq.s32.totalorder %v159, 1
    %v161 = vsel %vm160, %v155, 0.0
    %v162 = vmul.f32 %v161, %v161
    %163 = vadd.xlane.f32.xlu0 %v162
    %v164 = vpop.xlane.xlu0 %163
    %v165 = vmul.f32 %v164, 0.03125
    %v166 = vadd.f32 %v165, 1e-05
    %v167 = vrsqrt.pop %v166
    %v168 = vmul.f32 %v161, %v167
    %v169 = vlaneseq
    %v170 = vshrl.u32 %v169, 7
    %v171 = vsub.s32 1, %v170
    %v172 = vrot.slane %v98, %v171
    %v173 = vmul.f32 %v168, %v172
    %v174 = vlaneseq
    %v175 = vshrl.u32 %v174, 7
    %v176 = vsub.s32 2, %v175
    %v177 = vrot.slane %v98, %v176
    %v178 = vadd.f32 %v173, %v177
    %v179 = vpack.c.bf16 %v178, %v178
    %v180 = vld [vmem:[#allocation7] sm:$0xff]
    %v181 = vld [vmem:[#allocation7 + $0x8] sm:$0xff]
    %v182 = vld [vmem:[#allocation7 + $0x10] sm:$0xff]
    %v183 = vld [vmem:[#allocation7 + $0x18] sm:$0xff]
    %v184 = vld [vmem:[#allocation7 + $0x20] sm:$0xff]
    %v185 = vld [vmem:[#allocation7 + $0x28] sm:$0xff]
    %v186 = vld [vmem:[#allocation7 + $0x30] sm:$0xff]
    %v187 = vld [vmem:[#allocation7 + $0x38] sm:$0xff]
    %v188 = vld [vmem:[#allocation7 + $0x40] sm:$0xff]
    %v189 = vld [vmem:[#allocation7 + $0x48] sm:$0xff]
    %v190 = vld [vmem:[#allocation7 + $0x50] sm:$0xff]
    %v191 = vld [vmem:[#allocation7 + $0x58] sm:$0xff]
    %v192 = vld [vmem:[#allocation7 + $0x60] sm:$0xff]
    %v193 = vld [vmem:[#allocation7 + $0x68] sm:$0xff]
    %v194 = vld [vmem:[#allocation7 + $0x70] sm:$0xff]
    %v195 = vld [vmem:[#allocation7 + $0x78] sm:$0xff]
    %v196 = vld [vmem:[%s4] sm:$0x3]
    %v198 = vlaneseq
    %v199 = vshrl.u32 %v198, 7
    %v200 = vsub.s32 0, %v199
    %v201 = vrot.slane %v196, %v200
    %v202 = vlaneseq
    %v203 = vshrl.u32 %v202, 7
    %v204 = vsub.s32 1, %v203
    %v205 = vrot.slane %v196, %v204
    %v224 = vunpack.c.l.b16 %v180
    %v225 = vunpack.c.h.b16 %v180
    %v226 = vunpack.c.l.b16 %v181
    %v227 = vunpack.c.h.b16 %v181
    %v228 = vunpack.c.l.b16 %v182
    %v229 = vunpack.c.h.b16 %v182
    %v230 = vunpack.c.l.b16 %v183
    %v231 = vunpack.c.h.b16 %v183
    %v232 = vunpack.c.l.b16 %v184
    %v233 = vunpack.c.h.b16 %v184
    %v234 = vunpack.c.l.b16 %v185
    %v235 = vunpack.c.h.b16 %v185
    %v236 = vunpack.c.l.b16 %v186
    %v237 = vunpack.c.h.b16 %v186
    %v238 = vunpack.c.l.b16 %v187
    %v239 = vunpack.c.h.b16 %v187
    %v240 = vunpack.c.l.b16 %v188
    %v241 = vunpack.c.h.b16 %v188
    %v242 = vunpack.c.l.b16 %v189
    %v243 = vunpack.c.h.b16 %v189
    %v244 = vunpack.c.l.b16 %v190
    %v245 = vunpack.c.h.b16 %v190
    %v246 = vunpack.c.l.b16 %v191
    %v247 = vunpack.c.h.b16 %v191
    %v248 = vunpack.c.l.b16 %v192
    %v249 = vunpack.c.h.b16 %v192
    %v250 = vunpack.c.l.b16 %v193
    %v251 = vunpack.c.h.b16 %v193
    %v252 = vunpack.c.l.b16 %v194
    %v253 = vunpack.c.h.b16 %v194
    %v254 = vunpack.c.l.b16 %v195
    %v255 = vunpack.c.h.b16 %v195
    %v256 = vpack.c.b16 %v226, %v224
    %v257 = vpack.c.b16 %v227, %v225
    %v258 = vpack.c.b16 %v230, %v228
    %v259 = vpack.c.b16 %v231, %v229
    %v260 = vpack.c.b16 %v234, %v232
    %v261 = vpack.c.b16 %v235, %v233
    %v262 = vpack.c.b16 %v238, %v236
    %v263 = vpack.c.b16 %v239, %v237
    %v264 = vpack.c.b16 %v242, %v240
    %v265 = vpack.c.b16 %v243, %v241
    %v266 = vpack.c.b16 %v246, %v244
    %v267 = vpack.c.b16 %v247, %v245
    %v268 = vpack.c.b16 %v250, %v248
    %v269 = vpack.c.b16 %v251, %v249
    %v270 = vpack.c.b16 %v254, %v252
    %v271 = vpack.c.b16 %v255, %v253
    %288 = vmatprep.subr.bf16.mxu0 %v257
    %289 = vmatpush1.bf16.msra.mxu0 %v256
    %290 = vmatprep.subr.bf16.mxu0 %v259
    %291 = vmatpush1.bf16.msra.mxu0 %v258
    %292 = vmatprep.subr.bf16.mxu0 %v261
    %293 = vmatpush1.bf16.msra.mxu0 %v260
    %294 = vmatprep.subr.bf16.mxu0 %v263
    %295 = vmatpush1.bf16.msra.mxu0 %v262
    %296 = vmatprep.subr.bf16.mxu0 %v265
    %297 = vmatpush1.bf16.msra.mxu0 %v264
    %298 = vmatprep.subr.bf16.mxu0 %v267
    %299 = vmatpush1.bf16.msra.mxu0 %v266
    %300 = vmatprep.subr.bf16.mxu0 %v269
    %301 = vmatpush1.bf16.msra.mxu0 %v268
    %302 = vmatprep.subr.bf16.mxu0 %v271
    %303 = vmatpush1.bf16.msra.mxu0 %v270
    %304 = vmatprep.subr.bf16.mxu0 0
    %305 = vmatpush1.bf16.msra.mxu0 0
    %306 = vmatprep.subr.bf16.mxu0 0
    %307 = vmatpush1.bf16.msra.mxu0 0
    %308 = vmatprep.subr.bf16.mxu0 0
    %309 = vmatpush1.bf16.msra.mxu0 0
    %310 = vmatprep.subr.bf16.mxu0 0
    %311 = vmatpush1.bf16.msra.mxu0 0
    %312 = vmatprep.subr.bf16.mxu0 0
    %313 = vmatpush1.bf16.msra.mxu0 0
    %314 = vmatprep.subr.bf16.mxu0 0
    %315 = vmatpush1.bf16.msra.mxu0 0
    %316 = vmatprep.subr.bf16.mxu0 0
    %317 = vmatpush1.bf16.msra.mxu0 0
    %318 = vmatprep.subr.bf16.mxu0 0
    %319 = vmatpush1.bf16.msra.mxu0 0
    %320 = vmatprep.mubr.bf16.mxu0 0
    %321 = vmatmul.mubr.bf16.gmra.mrb[0].mxu0 %v179
    %v322 = vpop.f32.mrb[0].mxu0
    %v323 = vadd.f32 %v201, %v322
    %v324 = vpop.f32.mrb[0].mxu0
    %v325 = vadd.f32 %v205, %v324
    %v326 = vpop.f32.mrb[0].mxu0
    %v327 = vpop.f32.mrb[0].mxu0
    %328 = vdwg.mxu0
    %v329 = vmax.f32 %v325, 0.0
    %v330 = vpack.c.bf16 %v329, %v329
    %v331 = vld [vmem:[#allocation8] sm:$0xf]
    %v332 = vld [vmem:[#allocation8 + $0x4] sm:$0xf]
    %v333 = vld [vmem:[#allocation8 + $0x8] sm:$0xf]
    %v334 = vld [vmem:[#allocation8 + $0xc] sm:$0xf]
    %v335 = vld [vmem:[#allocation8 + $0x10] sm:$0xf]
    %v336 = vld [vmem:[#allocation8 + $0x14] sm:$0xf]
    %v337 = vld [vmem:[#allocation8 + $0x18] sm:$0xf]
    %v338 = vld [vmem:[#allocation8 + $0x1c] sm:$0xf]
    %v339 = vld [vmem:[#allocation8 + $0x20] sm:$0xf]
    %v340 = vld [vmem:[#allocation8 + $0x24] sm:$0xf]
    %v341 = vld [vmem:[#allocation8 + $0x28] sm:$0xf]
    %v342 = vld [vmem:[#allocation8 + $0x2c] sm:$0xf]
    %v343 = vld [vmem:[#allocation8 + $0x30] sm:$0xf]
    %v344 = vld [vmem:[#allocation8 + $0x34] sm:$0xf]
    %v345 = vld [vmem:[#allocation8 + $0x38] sm:$0xf]
    %v346 = vld [vmem:[#allocation8 + $0x3c] sm:$0xf]
    %v347 = vld [vmem:[%s6] sm:$0x1]
    %v349 = vlaneseq
    %v350 = vshrl.u32 %v349, 7
    %v351 = vsub.s32 0, %v350
    %v352 = vrot.slane %v347, %v351
    %v370 = vunpack.c.l.b16 %v331
    %v371 = vunpack.c.l.b16 %v332
    %v372 = vunpack.c.l.b16 %v333
    %v373 = vunpack.c.l.b16 %v334
    %v374 = vunpack.c.l.b16 %v335
    %v375 = vunpack.c.l.b16 %v336
    %v376 = vunpack.c.l.b16 %v337
    %v377 = vunpack.c.l.b16 %v338
    %v378 = vunpack.c.l.b16 %v339
    %v379 = vunpack.c.l.b16 %v340
    %v380 = vunpack.c.l.b16 %v341
    %v381 = vunpack.c.l.b16 %v342
    %v382 = vunpack.c.l.b16 %v343
    %v383 = vunpack.c.l.b16 %v344
    %v384 = vunpack.c.l.b16 %v345
    %v385 = vunpack.c.l.b16 %v346
    %v386 = vpack.c.b16 %v371, %v370
    %v387 = vpack.c.b16 %v373, %v372
    %v388 = vpack.c.b16 %v375, %v374
    %v389 = vpack.c.b16 %v377, %v376
    %v390 = vpack.c.b16 %v379, %v378
    %v391 = vpack.c.b16 %v381, %v380
    %v392 = vpack.c.b16 %v383, %v382
    %v393 = vpack.c.b16 %v385, %v384
    %402 = vmatprep.subr.bf16.mxu0 0
    %403 = vmatpush1.bf16.msra.mxu0 %v386
    %404 = vmatprep.subr.bf16.mxu0 0
    %405 = vmatpush1.bf16.msra.mxu0 %v387
    %406 = vmatprep.subr.bf16.mxu0 0
    %407 = vmatpush1.bf16.msra.mxu0 %v388
    %408 = vmatprep.subr.bf16.mxu0 0
    %409 = vmatpush1.bf16.msra.mxu0 %v389
    %410 = vmatprep.subr.bf16.mxu0 0
    %411 = vmatpush1.bf16.msra.mxu0 %v390
    %412 = vmatprep.subr.bf16.mxu0 0
    %413 = vmatpush1.bf16.msra.mxu0 %v391
    %414 = vmatprep.subr.bf16.mxu0 0
    %415 = vmatpush1.bf16.msra.mxu0 %v392
    %416 = vmatprep.subr.bf16.mxu0 0
    %417 = vmatpush1.bf16.msra.mxu0 %v393
    %418 = vmatprep.subr.bf16.mxu0 0
    %419 = vmatpush1.bf16.msra.mxu0 0
    %420 = vmatprep.subr.bf16.mxu0 0
    %421 = vmatpush1.bf16.msra.mxu0 0
    %422 = vmatprep.subr.bf16.mxu0 0
    %423 = vmatpush1.bf16.msra.mxu0 0
    %424 = vmatprep.subr.bf16.mxu0 0
    %425 = vmatpush1.bf16.msra.mxu0 0
    %426 = vmatprep.subr.bf16.mxu0 0
    %427 = vmatpush1.bf16.msra.mxu0 0
    %428 = vmatprep.subr.bf16.mxu0 0
    %429 = vmatpush1.bf16.msra.mxu0 0
    %430 = vmatprep.subr.bf16.mxu0 0
    %431 = vmatpush1.bf16.msra.mxu0 0
    %432 = vmatprep.subr.bf16.mxu0 0
    %433 = vmatpush1.bf16.msra.mxu0 0
    %434 = vmatprep.mubr.bf16.mxu0 0
    %435 = vmatmul.mubr.bf16.gmra.mrb[0].mxu0 %v330
    %v436 = vpop.f32.mrb[0].mxu0
    %v437 = vadd.f32 %v352, %v436
    %v438 = vpop.f32.mrb[0].mxu0
    %v439 = vpop.f32.mrb[0].mxu0
    %v440 = vpop.f32.mrb[0].mxu0
    %441 = vdwg.mxu0
    %v442 = vpack.c.bf16 %v437, %v437
    %v443 = vld [vmem:[#allocation10] sm:$0xf]
    %v444 = vld [vmem:[#allocation10 + $0x4] sm:$0xf]
    %v445 = vld [vmem:[#allocation10 + $0x8] sm:$0xf]
    %v446 = vld [vmem:[#allocation10 + $0xc] sm:$0xf]
    %v447 = vld [vmem:[#allocation10 + $0x10] sm:$0xf]
    %v448 = vld [vmem:[#allocation10 + $0x14] sm:$0xf]
    %v449 = vld [vmem:[#allocation10 + $0x18] sm:$0xf]
    %v450 = vld [vmem:[#allocation10 + $0x1c] sm:$0xf]
    %v451 = vld [vmem:[#allocation10 + $0x20] sm:$0xf]
    %v452 = vld [vmem:[#allocation10 + $0x24] sm:$0xf]
    %v453 = vld [vmem:[#allocation10 + $0x28] sm:$0xf]
    %v454 = vld [vmem:[#allocation10 + $0x2c] sm:$0xf]
    %v455 = vld [vmem:[#allocation10 + $0x30] sm:$0xf]
    %v456 = vld [vmem:[#allocation10 + $0x34] sm:$0xf]
    %v457 = vld [vmem:[#allocation10 + $0x38] sm:$0xf]
    %v458 = vld [vmem:[#allocation10 + $0x3c] sm:$0xf]
    %v459 = vld [vmem:[%s8] sm:$0x1]
    %v461 = vlaneseq
    %v462 = vshrl.u32 %v461, 7
    %v463 = vsub.s32 0, %v462
    %v464 = vrot.slane %v459, %v463
    %v482 = vunpack.c.l.b16 %v443
    %v483 = vunpack.c.l.b16 %v444
    %v484 = vunpack.c.l.b16 %v445
    %v485 = vunpack.c.l.b16 %v446
    %v486 = vunpack.c.l.b16 %v447
    %v487 = vunpack.c.l.b16 %v448
    %v488 = vunpack.c.l.b16 %v449
    %v489 = vunpack.c.l.b16 %v450
    %v490 = vunpack.c.l.b16 %v451
    %v491 = vunpack.c.l.b16 %v452
    %v492 = vunpack.c.l.b16 %v453
    %v493 = vunpack.c.l.b16 %v454
    %v494 = vunpack.c.l.b16 %v455
    %v495 = vunpack.c.l.b16 %v456
    %v496 = vunpack.c.l.b16 %v457
    %v497 = vunpack.c.l.b16 %v458
    %v498 = vpack.c.b16 %v483, %v482
    %v499 = vpack.c.b16 %v485, %v484
    %v500 = vpack.c.b16 %v487, %v486
    %v501 = vpack.c.b16 %v489, %v488
    %v502 = vpack.c.b16 %v491, %v490
    %v503 = vpack.c.b16 %v493, %v492
    %v504 = vpack.c.b16 %v495, %v494
    %v505 = vpack.c.b16 %v497, %v496
    %514 = vmatprep.subr.bf16.mxu0 0
    %515 = vmatpush1.bf16.msra.mxu0 %v498
    %516 = vmatprep.subr.bf16.mxu0 0
    %517 = vmatpush1.bf16.msra.mxu0 %v499
    %518 = vmatprep.subr.bf16.mxu0 0
    %519 = vmatpush1.bf16.msra.mxu0 %v500
    %520 = vmatprep.subr.bf16.mxu0 0
    %521 = vmatpush1.bf16.msra.mxu0 %v501
    %522 = vmatprep.subr.bf16.mxu0 0
    %523 = vmatpush1.bf16.msra.mxu0 %v502
    %524 = vmatprep.subr.bf16.mxu0 0
    %525 = vmatpush1.bf16.msra.mxu0 %v503
    %526 = vmatprep.subr.bf16.mxu0 0
    %527 = vmatpush1.bf16.msra.mxu0 %v504
    %528 = vmatprep.subr.bf16.mxu0 0
    %529 = vmatpush1.bf16.msra.mxu0 %v505
    %530 = vmatprep.subr.bf16.mxu0 0
    %531 = vmatpush1.bf16.msra.mxu0 0
    %532 = vmatprep.subr.bf16.mxu0 0
    %533 = vmatpush1.bf16.msra.mxu0 0
    %534 = vmatprep.subr.bf16.mxu0 0
    %535 = vmatpush1.bf16.msra.mxu0 0
    %536 = vmatprep.subr.bf16.mxu0 0
    %537 = vmatpush1.bf16.msra.mxu0 0
    %538 = vmatprep.subr.bf16.mxu0 0
    %539 = vmatpush1.bf16.msra.mxu0 0
    %540 = vmatprep.subr.bf16.mxu0 0
    %541 = vmatpush1.bf16.msra.mxu0 0
    %542 = vmatprep.subr.bf16.mxu0 0
    %543 = vmatpush1.bf16.msra.mxu0 0
    %544 = vmatprep.subr.bf16.mxu0 0
    %545 = vmatpush1.bf16.msra.mxu0 0
    %546 = vmatprep.mubr.bf16.mxu0 0
    %547 = vmatmul.mubr.bf16.gmra.mrb[0].mxu0 %v442
    %v548 = vpop.f32.mrb[0].mxu0
    %v549 = vadd.f32 %v464, %v548
    %v550 = vpop.f32.mrb[0].mxu0
    %v551 = vpop.f32.mrb[0].mxu0
    %v552 = vpop.f32.mrb[0].mxu0
    %553 = vdwg.mxu0
    %v554 = vmul.f32 %v178, %v178
    %555 = vadd.xlane.f32.xlu0 %v554
    %v556 = vpop.xlane.xlu0 %555
    %v557 = vrsqrt.pop %v556
    %v558 = vmul.f32 %v178, %v557
    %v559 = vmul.f32 %v437, %v437
    %560 = vadd.xlane.f32.xlu0 %v559
    %v561 = vpop.xlane.xlu0 %560
    %v562 = vrsqrt.pop %v561
    %v563 = vmul.f32 %v437, %v562
    %564 = vst [vmem:[#allocation11] sm:$0xff] %v323
    %565 = vst [vmem:[#allocation11 + $0x8] sm:$0xff] %v549
    %566 = vst [vmem:[#allocation11 + $0x10] sm:$0xff] %v558
    %567 = vst [vmem:[#allocation11 + $0x18] sm:$0xff] %v563
    // Predicated region
    $region58: #{tpu_custom_call.1} parent=1 // pred_check
      _
    $region59: #{tpu_custom_call.1} parent=1 // pred_check_branch
      %569 = sbr.rel (0) target = $region61
    $region60: #{tpu_custom_call.1} parent=1 // pred_region
      %s571 = ssub.s32 512, 512
      %572 = vsyncadd [#allocation4], %s571
      %s574 = sshll.u32 [#allocation11], 4
      %s575 = int_to_ptr.vmem [resolvable:$true] %s574
      %577 = dma.vmem_to_hbm [thread:$0]  %s575, 512, %s9, [#allocation4]
    $region61: #{tpu_custom_call.1} parent=1 // pred_fallthru
      _
    // Predicated region
    $region62: #{tpu_custom_call.1} parent=1 // pred_check
      _
    $region63: #{tpu_custom_call.1} parent=1 // pred_check_branch
      %579 = sbr.rel (0) target = $region65
    $region64: #{tpu_custom_call.1} parent=1 // pred_region
      %580 = dma.done [#allocation4], 512
    $region65: #{tpu_custom_call.1} parent=1 // pred_fallthru
      _
    %581 = vsyncpa [#allocation3], 1
    %582 = vsyncpa [#allocation6], 1
    %583 = vsyncpa [#allocation9], 1
    %584 = vsyncpa [#allocation4], 1

</llo_original>
